<compile_context>
chip_gen: v7x
topology: tpu7x:2x2x1
jax: 0.10.0
libtpu: 0.0.40
codegen_flags: <defaults>
</compile_context>

<pallas_src>
import functools

import jax
import jax.numpy as jnp
import numpy as np
from jax.experimental import pallas as pl
from jax.experimental.pallas import tpu as pltpu


# --------------------------------------------------------------------------- #
# Pallas kernel: fused CenterNet loss partial sums (focal + BCE + SmoothL1)
# --------------------------------------------------------------------------- #
def _centernet_loss_kernel(*refs, num_classes, num_stacks, hw, tile,
                           tiles_per_core):
    # refs = (tgt_ref, [txty_ref, twth_ref, cls_ref] * num_stacks, out_ref)
    # tgt_ref  : (B, C+5, tile)  -> [gt_cls(C), gt_txty(2), gt_twth(2), weight(1)]
    # pred refs: (B, 2, tile), (B, 2, tile), (B, C, tile) per stack
    # out_ref  : (1, 3, tile) f32 VMEM, resident across the tile axis
    #            rows: [cls_focal, txty_bce_weighted, twth_sl1_weighted] per-lane sums
    tgt_ref = refs[0]
    pred_refs = refs[1:1 + 3 * num_stacks]
    out_ref = refs[1 + 3 * num_stacks]

    c = pl.program_id(0)          # core-split axis ("parallel")
    j = pl.program_id(1)          # HW tile axis    ("arbitrary" / reduction)
    blk = c * tiles_per_core + j  # global HW block index

    @pl.when(j == 0)
    def _init():
        out_ref[...] = jnp.zeros_like(out_ref)

    tgt = tgt_ref[...].astype(jnp.float32)                    # (B, C+5, tile)
    gt_cls = tgt[:, 0:num_classes, :]                         # (B, C, tile)
    gt_txty = tgt[:, num_classes:num_classes + 2, :]          # (B, 2, tile)
    gt_twth = tgt[:, num_classes + 2:num_classes + 4, :]      # (B, 2, tile)
    gt_w = tgt[:, num_classes + 4, :]                         # (B, tile)

    # lane validity mask (handles the padded last block when HW % tile != 0)
    lane = jax.lax.broadcasted_iota(jnp.int32, (1, tile), 1)
    valid = (blk * tile + lane) < hw                          # (1, tile)

    # target-side focal terms, hoisted out of the stack loop
    pos = gt_cls == 1.0
    q = 1.0 - gt_cls
    q2 = q * q
    q4 = q2 * q2                                              # (1-gt)^4, no pow

    cls_part = jnp.zeros((1, tile), jnp.float32)
    txty_part = jnp.zeros((1, tile), jnp.float32)
    twth_part = jnp.zeros((1, tile), jnp.float32)

    for s in range(num_stacks):
        txty_x = pred_refs[3 * s + 0][...].astype(jnp.float32)   # (B, 2, tile)
        twth_x = pred_refs[3 * s + 1][...].astype(jnp.float32)   # (B, 2, tile)
        cls_x = pred_refs[3 * s + 2][...].astype(jnp.float32)    # (B, C, tile)

        # ---- Gaussian focal loss on class heatmap (logit-space, EUP-light) ----
        e = jnp.exp(-jnp.abs(cls_x))
        log1pe = jnp.log1p(e)
        p = jnp.where(cls_x >= 0.0, 1.0, e) / (1.0 + e)          # sigmoid(x)
        log_p = jnp.minimum(cls_x, 0.0) - log1pe                 # log sigmoid(x)
        log_1mp = -jnp.maximum(cls_x, 0.0) - log1pe              # log(1 - sigmoid(x))
        omp = 1.0 - p
        center = omp * omp * log_p
        other = q4 * (p * p) * log_1mp
        focal = -jnp.where(pos, center, other)                   # (B, C, tile)
        cls_part += jnp.sum(focal, axis=(0, 1), keepdims=True)[0]

        # ---- BCE-with-logits on txty, weighted per pixel ----
        bce = (jnp.maximum(txty_x, 0.0) - txty_x * gt_txty
               + jnp.log1p(jnp.exp(-jnp.abs(txty_x))))           # (B, 2, tile)
        txty_part += jnp.sum(jnp.sum(bce, axis=1) * gt_w, axis=0, keepdims=True)

        # ---- SmoothL1 on twth, weighted per pixel ----
        d = twth_x - gt_twth
        ad = jnp.abs(d)
        sl1 = jnp.where(ad < 1.0, 0.5 * d * d, ad - 0.5)         # (B, 2, tile)
        twth_part += jnp.sum(jnp.sum(sl1, axis=1) * gt_w, axis=0, keepdims=True)

    zero = jnp.zeros((1, tile), jnp.float32)
    cls_part = jnp.where(valid, cls_part, zero)
    txty_part = jnp.where(valid, txty_part, zero)
    twth_part = jnp.where(valid, twth_part, zero)

    upd = jnp.concatenate([cls_part, txty_part, twth_part], axis=0)  # (3, tile)
    out_ref[...] += upd[None, :, :]


# --------------------------------------------------------------------------- #
# Wrapper: one fused pallas_call over all stacks
# --------------------------------------------------------------------------- #
def _centernet_losses(stacks, target, num_classes):
    """stacks: list of (cls_pred, txty_pred, twth_pred), each NCHW.
    target : (B, H*W, C+4+1) = (cls heatmap, txty gt, twth gt, weight)
             (channel-first (B, C+5, H*W) also accepted, avoiding a transpose).
    Returns [total, cls, txty, twth] scalars, already summed over stacks."""
    cls0 = stacks[0][0]
    B, C, H, W = cls0.shape
    assert C == num_classes
    HW = H * W
    num_stacks = len(stacks)
    ct = num_classes + 5

    # Target to channel-first (lane-dense HW-last). Ideally built upstream in
    # this layout; otherwise a single transpose pass here.
    if target.shape == (B, ct, HW):
        tgt = target
    elif target.shape == (B, HW, ct):
        tgt = jnp.transpose(target, (0, 2, 1))
    else:
        raise ValueError(f"unexpected target shape {target.shape}")

    # Predictions: free reshapes from NCHW, no transpose/concat/astype passes.
    preds = []
    for (cls_p, txty_p, twth_p) in stacks:
        preds.append(txty_p.reshape(B, 2, HW))
        preds.append(twth_p.reshape(B, 2, HW))
        preds.append(cls_p.reshape(B, num_classes, HW))

    # Tile (lane) size: multiple of 128, sized against ~16 MiB of double-buffered
    # input VMEM (fits v7x's smaller VMEM with headroom), capped at 2048.
    total_ch = ct + num_stacks * (num_classes + 4)
    bytes_per_lane = total_ch * B * 4 * 2        # f32 worst case, x2 buffers
    tile = (16 * 1024 * 1024) // bytes_per_lane
    tile = max(128, min(2048, (tile // 128) * 128))
    hw_ceil = ((HW + 127) // 128) * 128
    tile = min(tile, hw_ceil)

    n_tiles = pl.cdiv(HW, tile)
    # Split the reduction across 2 TensorCores (v7x megacore) when it divides
    # evenly; no effect on single-core v5e/v6e.
    cores = 2 if (n_tiles % 2 == 0 and n_tiles >= 2) else 1
    tiles_per_core = n_tiles // cores

    def in_map(c, j, _tpc=tiles_per_core):
        return (0, 0, c * _tpc + j)

    in_specs = [pl.BlockSpec((B, ct, tile), in_map)]
    for _ in range(num_stacks):
        in_specs.append(pl.BlockSpec((B, 2, tile), in_map))
        in_specs.append(pl.BlockSpec((B, 2, tile), in_map))
        in_specs.append(pl.BlockSpec((B, num_classes, tile), in_map))

    out_spec = pl.BlockSpec((1, 3, tile), lambda c, j: (c, 0, 0))

    kernel = functools.partial(
        _centernet_loss_kernel,
        num_classes=num_classes, num_stacks=num_stacks,
        hw=HW, tile=tile, tiles_per_core=tiles_per_core)

    # NOTE: if profiling shows exposed DMA, add pipeline_mode=pl.Buffered(3)
    # to the input BlockSpecs.
    partials = pl.pallas_call(
        kernel,
        out_shape=jax.ShapeDtypeStruct((cores, 3, tile), jnp.float32),
        grid_spec=pltpu.PrefetchScalarGridSpec(
            num_scalar_prefetch=0,
            grid=(cores, tiles_per_core),
            in_specs=in_specs,
            out_specs=out_spec,
        ),
        compiler_params=pltpu.CompilerParams(
            dimension_semantics=("parallel", "arbitrary"),
            vmem_limit_bytes=40 * 1024 * 1024,
        ),
    )(tgt, *preds)

    sums = jnp.sum(partials, axis=(0, 2))        # (3,) tiny final reduction
    bsz = jnp.float32(B)
    cls_loss = sums[0] / bsz
    txty_loss = sums[1] / bsz
    twth_loss = sums[2] / bsz
    total_loss = cls_loss + txty_loss + twth_loss
    return [total_loss, cls_loss, txty_loss, twth_loss]


# --------------------------------------------------------------------------- #
# Module wrapper (mirrors centernet_loss_module.forward)
# --------------------------------------------------------------------------- #
class CenternetLossModulePallas:
    def __init__(self, num_classes, stride=4, nstack=2):
        # No learnable parameters; stride only affects how the target heatmap was
        # built upstream, not the loss math itself.
        self.num_classes = num_classes
        self.stride = stride
        self.nstack = nstack

    def __call__(self, inputs, target=None):
        result = []
        if self.nstack == 1:
            result.append(_centernet_losses([inputs[0]], target, self.num_classes))
        elif self.nstack == 2:
            if target is None:
                # TODO(synk): inference-time decode path of centernet_Loss (target=None)
                # is not defined in the provided source; only the training loss is implemented.
                raise NotImplementedError("target=None inference path not implemented")
            else:
                # Both stacks fused into a single pallas_call; the module sums the
                # two stacks' loss lists, which is exactly the fused accumulation.
                result.append(_centernet_losses([inputs[0], inputs[1]], target,
                                                self.num_classes))
        return result


# --------------------------------------------------------------------------- #
# Pure-JAX reference (for correctness check) — original sigmoid + eps form
# --------------------------------------------------------------------------- #
def _ref_single_loss(cls_p, txty_p, twth_p, target, num_classes):
    B, C, H, W = cls_p.shape
    pred_nchw = jnp.concatenate((txty_p, twth_p, cls_p), axis=1)
    pred = jnp.transpose(pred_nchw, (0, 2, 3, 1)).reshape(B, H * W, C + 4)
    pred = pred.astype(jnp.float32)
    txty, twth, cls = pred[..., :2], pred[..., 2:4], pred[..., 4:]
    gt_cls = target[..., :num_classes]
    gt_txty = target[..., num_classes:num_classes + 2]
    gt_twth = target[..., num_classes + 2:num_classes + 4]
    w = target[..., -1]
    p = jax.nn.sigmoid(cls)
    cid = (gt_cls == 1.0).astype(jnp.float32)
    cls_l = jnp.sum(-cid * (1 - p) ** 2 * jnp.log(p + 1e-14)
                    - (1 - cid) * (1 - gt_cls) ** 4 * p ** 2 * jnp.log(1 - p + 1e-14)) / B
    bce = jnp.maximum(txty, 0.0) - txty * gt_txty + jnp.log1p(jnp.exp(-jnp.abs(txty)))
    txty_l = jnp.sum(jnp.sum(bce, -1) * w) / B
    d = twth - gt_twth
    ad = jnp.abs(d)
    sl1 = jnp.where(ad < 1.0, 0.5 * d * d, ad - 0.5)
    twth_l = jnp.sum(jnp.sum(sl1, -1) * w) / B
    return [cls_l + txty_l + twth_l, cls_l, txty_l, twth_l]


if __name__ == "__main__":
    key = jax.random.PRNGKey(0)
    B, C, H, W = 2, 4, 16, 16          # batch, num classes, feature-map spatial dims
    HW = H * W

    keys = jax.random.split(key, 10)
    # Two hourglass stacks, each producing (cls_pred, txty_pred, twth_pred) in NCHW.
    stacks = []
    for s in range(2):
        cls_pred = jax.random.normal(keys[3 * s + 0], (B, C, H, W), jnp.float32)
        txty_pred = jax.random.normal(keys[3 * s + 1], (B, 2, H, W), jnp.float32)
        twth_pred = jax.random.normal(keys[3 * s + 2], (B, 2, H, W), jnp.float32)
        stacks.append((cls_pred, txty_pred, twth_pred))

    # Target: [B, H*W, C + 4 + 1] = (gaussian cls heatmap, txty gt, twth gt, weight)
    gt_cls = jax.random.uniform(keys[6], (B, HW, C), jnp.float32, 0.0, 0.9)
    # mark a few exact positive centers (value == 1.0) so the focal positive branch is used
    gt_cls = gt_cls.at[0, 10, 1].set(1.0).at[0, 77, 3].set(1.0).at[1, 200, 0].set(1.0)
    gt_txty = jax.random.uniform(keys[7], (B, HW, 2), jnp.float32)
    gt_twth = jax.random.normal(keys[8], (B, HW, 2), jnp.float32)
    gt_weight = (jax.random.uniform(keys[9], (B, HW, 1), jnp.float32) > 0.9).astype(jnp.float32)
    target = jnp.concatenate([gt_cls, gt_txty, gt_twth, gt_weight], axis=-1)

    module = CenternetLossModulePallas(num_classes=C, stride=4, nstack=2)
    out = module(stacks, target)
    out = jax.block_until_ready(out)

    # Reference check (sum of the two stacks, like the PyTorch module).
    ref1 = _ref_single_loss(stacks[0][0], stacks[0][1], stacks[0][2], target, C)
    ref2 = _ref_single_loss(stacks[1][0], stacks[1][1], stacks[1][2], target, C)
    ref = [a + b for a, b in zip(ref1, ref2)]

    got = np.array([float(v) for v in out[0]])
    exp = np.array([float(v) for v in ref])
    np.testing.assert_allclose(got, exp, rtol=5e-4, atol=5e-4)

    print("KERNEL_OK")
</pallas_src>

<mosaic_0001>
module attributes {stable_mosaic.version = 11 : i64} {
  func.func @_centernet_loss_kernel(%arg0: i32, %arg1: i32, %arg2: memref<2x9x256xf32, #tpu.memory_space<vmem>>, %arg3: memref<2x2x256xf32, #tpu.memory_space<vmem>>, %arg4: memref<2x2x256xf32, #tpu.memory_space<vmem>>, %arg5: memref<2x4x256xf32, #tpu.memory_space<vmem>>, %arg6: memref<2x2x256xf32, #tpu.memory_space<vmem>>, %arg7: memref<2x2x256xf32, #tpu.memory_space<vmem>>, %arg8: memref<2x4x256xf32, #tpu.memory_space<vmem>>, %arg9: memref<1x3x256xf32, #tpu.memory_space<vmem>>) attributes {dimension_semantics = [#tpu.dimension_semantics<parallel>, #tpu.dimension_semantics<arbitrary>], iteration_bounds = array<i64: 1, 1>, scalar_prefetch = 0 : i64, scratch_operands = 0 : i64, tpu.core_type = #tpu.core_type<tc>, window_params = [{transform_indices = @transform_0, window_bounds = array<i64: 2, 9, 256>}, {transform_indices = @transform_1, window_bounds = array<i64: 2, 2, 256>}, {transform_indices = @transform_2, window_bounds = array<i64: 2, 2, 256>}, {transform_indices = @transform_3, window_bounds = array<i64: 2, 4, 256>}, {transform_indices = @transform_4, window_bounds = array<i64: 2, 2, 256>}, {transform_indices = @transform_5, window_bounds = array<i64: 2, 2, 256>}, {transform_indices = @transform_6, window_bounds = array<i64: 2, 4, 256>}, {transform_indices = @transform_7, window_bounds = array<i64: 1, 3, 256>}]} {
    %c1_i32 = arith.constant 1 : i32
    %0 = arith.muli %arg0, %c1_i32 : i32
    %1 = arith.addi %0, %arg1 : i32
    %c0_i32 = arith.constant 0 : i32
    %2 = arith.cmpi eq, %arg1, %c0_i32 : i32
    %3 = arith.extui %2 : i1 to i32
    %c0_i32_0 = arith.constant 0 : i32
    %4 = arith.cmpi ne, %3, %c0_i32_0 : i32
    scf.if %4 {
      %cst_71 = arith.constant 0.000000e+00 : f32
      %169 = vector.broadcast %cst_71 : f32 to vector<1x3x256xf32>
      %c0_72 = arith.constant 0 : index
      %c0_73 = arith.constant 0 : index
      %c0_74 = arith.constant 0 : index
      %170 = vector.load %arg9[%c0_72, %c0_73, %c0_74] : memref<1x3x256xf32, #tpu.memory_space<vmem>>, vector<1x3x256xf32>
      tpu.vector_store %arg9[%c0_72, %c0_73, %c0_74], %169 {strides = array<i32>} : memref<1x3x256xf32, #tpu.memory_space<vmem>>, vector<1x3x256xf32>,
    } else {
    }
    %c0 = arith.constant 0 : index
    %c0_1 = arith.constant 0 : index
    %c0_2 = arith.constant 0 : index
    %5 = vector.load %arg2[%c0, %c0_1, %c0_2] : memref<2x9x256xf32, #tpu.memory_space<vmem>>, vector<2x9x256xf32>
    %6 = vector.extract_strided_slice %5 {offsets = [0, 0, 0], sizes = [2, 4, 256], strides = [1, 1, 1]} : vector<2x9x256xf32> to vector<2x4x256xf32>
    %7 = vector.extract_strided_slice %5 {offsets = [0, 4, 0], sizes = [2, 2, 256], strides = [1, 1, 1]} : vector<2x9x256xf32> to vector<2x2x256xf32>
    %8 = vector.extract_strided_slice %5 {offsets = [0, 6, 0], sizes = [2, 2, 256], strides = [1, 1, 1]} : vector<2x9x256xf32> to vector<2x2x256xf32>
    %9 = vector.extract_strided_slice %5 {offsets = [0, 8, 0], sizes = [2, 1, 256], strides = [1, 1, 1]} : vector<2x9x256xf32> to vector<2x1x256xf32>
    %10 = vector.shape_cast %9 : vector<2x1x256xf32> to vector<2x256xf32>
    %11 = tpu.iota {dimensions = array<i32: 1>} : vector<1x256xi32>
    %c256_i32 = arith.constant 256 : i32
    %12 = arith.muli %1, %c256_i32 : i32
    %13 = vector.broadcast %12 : i32 to vector<1x256xi32>
    %14 = arith.addi %13, %11 : vector<1x256xi32>
    %c256_i32_3 = arith.constant 256 : i32
    %15 = vector.broadcast %c256_i32_3 : i32 to vector<1x256xi32>
    %16 = arith.cmpi slt, %14, %15 : vector<1x256xi32>
    %cst = arith.constant 1.000000e+00 : f32
    %17 = vector.broadcast %cst : f32 to vector<2x4x256xf32>
    %18 = arith.cmpf oeq, %6, %17 : vector<2x4x256xf32>
    %cst_4 = arith.constant 1.000000e+00 : f32
    %19 = vector.broadcast %cst_4 : f32 to vector<2x4x256xf32>
    %20 = arith.subf %19, %6 : vector<2x4x256xf32>
    %21 = arith.mulf %20, %20 : vector<2x4x256xf32>
    %22 = arith.mulf %21, %21 : vector<2x4x256xf32>
    %cst_5 = arith.constant 0.000000e+00 : f32
    %23 = vector.broadcast %cst_5 : f32 to vector<1x256xf32>
    %cst_6 = arith.constant 0.000000e+00 : f32
    %24 = vector.broadcast %cst_6 : f32 to vector<1x256xf32>
    %cst_7 = arith.constant 0.000000e+00 : f32
    %25 = vector.broadcast %cst_7 : f32 to vector<1x256xf32>
    %c0_8 = arith.constant 0 : index
    %c0_9 = arith.constant 0 : index
    %c0_10 = arith.constant 0 : index
    %26 = vector.load %arg3[%c0_8, %c0_9, %c0_10] : memref<2x2x256xf32, #tpu.memory_space<vmem>>, vector<2x2x256xf32>
    %c0_11 = arith.constant 0 : index
    %c0_12 = arith.constant 0 : index
    %c0_13 = arith.constant 0 : index
    %27 = vector.load %arg4[%c0_11, %c0_12, %c0_13] : memref<2x2x256xf32, #tpu.memory_space<vmem>>, vector<2x2x256xf32>
    %c0_14 = arith.constant 0 : index
    %c0_15 = arith.constant 0 : index
    %c0_16 = arith.constant 0 : index
    %28 = vector.load %arg5[%c0_14, %c0_15, %c0_16] : memref<2x4x256xf32, #tpu.memory_space<vmem>>, vector<2x4x256xf32>
    %29 = math.absf %28 : vector<2x4x256xf32>
    %cst_17 = arith.constant 0.000000e+00 : f32
    %30 = vector.broadcast %cst_17 : f32 to vector<2x4x256xf32>
    %31 = arith.subf %30, %29 : vector<2x4x256xf32>
    %32 = math.exp %31 : vector<2x4x256xf32>
    %33 = math.log1p %32 : vector<2x4x256xf32>
    %cst_18 = arith.constant 0.000000e+00 : f32
    %34 = vector.broadcast %cst_18 : f32 to vector<2x4x256xf32>
    %35 = arith.cmpf oge, %28, %34 : vector<2x4x256xf32>
    %cst_19 = arith.constant 1.000000e+00 : f32
    %36 = vector.broadcast %cst_19 : f32 to vector<2x4x256xf32>
    %37 = arith.select %35, %36, %32 : vector<2x4x256xi1>, vector<2x4x256xf32>
    %cst_20 = arith.constant 1.000000e+00 : f32
    %38 = vector.broadcast %cst_20 : f32 to vector<2x4x256xf32>
    %39 = arith.addf %38, %32 : vector<2x4x256xf32>
    %40 = arith.divf %37, %39 : vector<2x4x256xf32>
    %cst_21 = arith.constant 0.000000e+00 : f32
    %41 = vector.broadcast %cst_21 : f32 to vector<2x4x256xf32>
    %42 = arith.minimumf %28, %41 : vector<2x4x256xf32>
    %43 = arith.subf %42, %33 : vector<2x4x256xf32>
    %cst_22 = arith.constant 0.000000e+00 : f32
    %44 = vector.broadcast %cst_22 : f32 to vector<2x4x256xf32>
    %45 = arith.maximumf %28, %44 : vector<2x4x256xf32>
    %cst_23 = arith.constant 0.000000e+00 : f32
    %46 = vector.broadcast %cst_23 : f32 to vector<2x4x256xf32>
    %47 = arith.subf %46, %45 : vector<2x4x256xf32>
    %48 = arith.subf %47, %33 : vector<2x4x256xf32>
    %cst_24 = arith.constant 1.000000e+00 : f32
    %49 = vector.broadcast %cst_24 : f32 to vector<2x4x256xf32>
    %50 = arith.subf %49, %40 : vector<2x4x256xf32>
    %51 = arith.mulf %50, %50 : vector<2x4x256xf32>
    %52 = arith.mulf %51, %43 : vector<2x4x256xf32>
    %53 = arith.mulf %40, %40 : vector<2x4x256xf32>
    %54 = arith.mulf %22, %53 : vector<2x4x256xf32>
    %55 = arith.mulf %54, %48 : vector<2x4x256xf32>
    %56 = arith.select %18, %52, %55 : vector<2x4x256xi1>, vector<2x4x256xf32>
    %cst_25 = arith.constant 0.000000e+00 : f32
    %57 = vector.broadcast %cst_25 : f32 to vector<2x4x256xf32>
    %58 = arith.subf %57, %56 : vector<2x4x256xf32>
    %cst_26 = arith.constant dense<0.000000e+00> : vector<256xf32>
    %59 = vector.multi_reduction <add>, %58, %cst_26 [0, 1] : vector<2x4x256xf32> to vector<256xf32>
    %60 = vector.shape_cast %59 : vector<256xf32> to vector<1x1x256xf32>
    %61 = vector.shape_cast %60 : vector<1x1x256xf32> to vector<1x256xf32>
    %62 = arith.addf %23, %61 : vector<1x256xf32>
    %cst_27 = arith.constant 0.000000e+00 : f32
    %63 = vector.broadcast %cst_27 : f32 to vector<2x2x256xf32>
    %64 = arith.maximumf %26, %63 : vector<2x2x256xf32>
    %65 = arith.mulf %26, %7 : vector<2x2x256xf32>
    %66 = arith.subf %64, %65 : vector<2x2x256xf32>
    %67 = math.absf %26 : vector<2x2x256xf32>
    %cst_28 = arith.constant 0.000000e+00 : f32
    %68 = vector.broadcast %cst_28 : f32 to vector<2x2x256xf32>
    %69 = arith.subf %68, %67 : vector<2x2x256xf32>
    %70 = math.exp %69 : vector<2x2x256xf32>
    %71 = math.log1p %70 : vector<2x2x256xf32>
    %72 = arith.addf %66, %71 : vector<2x2x256xf32>
    %cst_29 = arith.constant dense<0.000000e+00> : vector<2x256xf32>
    %73 = vector.multi_reduction <add>, %72, %cst_29 [1] : vector<2x2x256xf32> to vector<2x256xf32>
    %74 = arith.mulf %73, %10 : vector<2x256xf32>
    %cst_30 = arith.constant dense<0.000000e+00> : vector<256xf32>
    %75 = vector.multi_reduction <add>, %74, %cst_30 [0] : vector<2x256xf32> to vector<256xf32>
    %76 = vector.shape_cast %75 : vector<256xf32> to vector<1x256xf32>
    %77 = arith.addf %24, %76 : vector<1x256xf32>
    %78 = arith.subf %27, %8 : vector<2x2x256xf32>
    %79 = math.absf %78 : vector<2x2x256xf32>
    %cst_31 = arith.constant 1.000000e+00 : f32
    %80 = vector.broadcast %cst_31 : f32 to vector<2x2x256xf32>
    %81 = arith.cmpf olt, %79, %80 : vector<2x2x256xf32>
    %cst_32 = arith.constant 5.000000e-01 : f32
    %82 = vector.broadcast %cst_32 : f32 to vector<2x2x256xf32>
    %83 = arith.mulf %82, %78 : vector<2x2x256xf32>
    %84 = arith.mulf %83, %78 : vector<2x2x256xf32>
    %cst_33 = arith.constant 5.000000e-01 : f32
    %85 = vector.broadcast %cst_33 : f32 to vector<2x2x256xf32>
    %86 = arith.subf %79, %85 : vector<2x2x256xf32>
    %87 = arith.select %81, %84, %86 : vector<2x2x256xi1>, vector<2x2x256xf32>
    %cst_34 = arith.constant dense<0.000000e+00> : vector<2x256xf32>
    %88 = vector.multi_reduction <add>, %87, %cst_34 [1] : vector<2x2x256xf32> to vector<2x256xf32>
    %89 = arith.mulf %88, %10 : vector<2x256xf32>
    %cst_35 = arith.constant dense<0.000000e+00> : vector<256xf32>
    %90 = vector.multi_reduction <add>, %89, %cst_35 [0] : vector<2x256xf32> to vector<256xf32>
    %91 = vector.shape_cast %90 : vector<256xf32> to vector<1x256xf32>
    %92 = arith.addf %25, %91 : vector<1x256xf32>
    %c0_36 = arith.constant 0 : index
    %c0_37 = arith.constant 0 : index
    %c0_38 = arith.constant 0 : index
    %93 = vector.load %arg6[%c0_36, %c0_37, %c0_38] : memref<2x2x256xf32, #tpu.memory_space<vmem>>, vector<2x2x256xf32>
    %c0_39 = arith.constant 0 : index
    %c0_40 = arith.constant 0 : index
    %c0_41 = arith.constant 0 : index
    %94 = vector.load %arg7[%c0_39, %c0_40, %c0_41] : memref<2x2x256xf32, #tpu.memory_space<vmem>>, vector<2x2x256xf32>
    %c0_42 = arith.constant 0 : index
    %c0_43 = arith.constant 0 : index
    %c0_44 = arith.constant 0 : index
    %95 = vector.load %arg8[%c0_42, %c0_43, %c0_44] : memref<2x4x256xf32, #tpu.memory_space<vmem>>, vector<2x4x256xf32>
    %96 = math.absf %95 : vector<2x4x256xf32>
    %cst_45 = arith.constant 0.000000e+00 : f32
    %97 = vector.broadcast %cst_45 : f32 to vector<2x4x256xf32>
    %98 = arith.subf %97, %96 : vector<2x4x256xf32>
    %99 = math.exp %98 : vector<2x4x256xf32>
    %100 = math.log1p %99 : vector<2x4x256xf32>
    %cst_46 = arith.constant 0.000000e+00 : f32
    %101 = vector.broadcast %cst_46 : f32 to vector<2x4x256xf32>
    %102 = arith.cmpf oge, %95, %101 : vector<2x4x256xf32>
    %cst_47 = arith.constant 1.000000e+00 : f32
    %103 = vector.broadcast %cst_47 : f32 to vector<2x4x256xf32>
    %104 = arith.select %102, %103, %99 : vector<2x4x256xi1>, vector<2x4x256xf32>
    %cst_48 = arith.constant 1.000000e+00 : f32
    %105 = vector.broadcast %cst_48 : f32 to vector<2x4x256xf32>
    %106 = arith.addf %105, %99 : vector<2x4x256xf32>
    %107 = arith.divf %104, %106 : vector<2x4x256xf32>
    %cst_49 = arith.constant 0.000000e+00 : f32
    %108 = vector.broadcast %cst_49 : f32 to vector<2x4x256xf32>
    %109 = arith.minimumf %95, %108 : vector<2x4x256xf32>
    %110 = arith.subf %109, %100 : vector<2x4x256xf32>
    %cst_50 = arith.constant 0.000000e+00 : f32
    %111 = vector.broadcast %cst_50 : f32 to vector<2x4x256xf32>
    %112 = arith.maximumf %95, %111 : vector<2x4x256xf32>
    %cst_51 = arith.constant 0.000000e+00 : f32
    %113 = vector.broadcast %cst_51 : f32 to vector<2x4x256xf32>
    %114 = arith.subf %113, %112 : vector<2x4x256xf32>
    %115 = arith.subf %114, %100 : vector<2x4x256xf32>
    %cst_52 = arith.constant 1.000000e+00 : f32
    %116 = vector.broadcast %cst_52 : f32 to vector<2x4x256xf32>
    %117 = arith.subf %116, %107 : vector<2x4x256xf32>
    %118 = arith.mulf %117, %117 : vector<2x4x256xf32>
    %119 = arith.mulf %118, %110 : vector<2x4x256xf32>
    %120 = arith.mulf %107, %107 : vector<2x4x256xf32>
    %121 = arith.mulf %22, %120 : vector<2x4x256xf32>
    %122 = arith.mulf %121, %115 : vector<2x4x256xf32>
    %123 = arith.select %18, %119, %122 : vector<2x4x256xi1>, vector<2x4x256xf32>
    %cst_53 = arith.constant 0.000000e+00 : f32
    %124 = vector.broadcast %cst_53 : f32 to vector<2x4x256xf32>
    %125 = arith.subf %124, %123 : vector<2x4x256xf32>
    %cst_54 = arith.constant dense<0.000000e+00> : vector<256xf32>
    %126 = vector.multi_reduction <add>, %125, %cst_54 [0, 1] : vector<2x4x256xf32> to vector<256xf32>
    %127 = vector.shape_cast %126 : vector<256xf32> to vector<1x1x256xf32>
    %128 = vector.shape_cast %127 : vector<1x1x256xf32> to vector<1x256xf32>
    %129 = arith.addf %62, %128 : vector<1x256xf32>
    %cst_55 = arith.constant 0.000000e+00 : f32
    %130 = vector.broadcast %cst_55 : f32 to vector<2x2x256xf32>
    %131 = arith.maximumf %93, %130 : vector<2x2x256xf32>
    %132 = arith.mulf %93, %7 : vector<2x2x256xf32>
    %133 = arith.subf %131, %132 : vector<2x2x256xf32>
    %134 = math.absf %93 : vector<2x2x256xf32>
    %cst_56 = arith.constant 0.000000e+00 : f32
    %135 = vector.broadcast %cst_56 : f32 to vector<2x2x256xf32>
    %136 = arith.subf %135, %134 : vector<2x2x256xf32>
    %137 = math.exp %136 : vector<2x2x256xf32>
    %138 = math.log1p %137 : vector<2x2x256xf32>
    %139 = arith.addf %133, %138 : vector<2x2x256xf32>
    %cst_57 = arith.constant dense<0.000000e+00> : vector<2x256xf32>
    %140 = vector.multi_reduction <add>, %139, %cst_57 [1] : vector<2x2x256xf32> to vector<2x256xf32>
    %141 = arith.mulf %140, %10 : vector<2x256xf32>
    %cst_58 = arith.constant dense<0.000000e+00> : vector<256xf32>
    %142 = vector.multi_reduction <add>, %141, %cst_58 [0] : vector<2x256xf32> to vector<256xf32>
    %143 = vector.shape_cast %142 : vector<256xf32> to vector<1x256xf32>
    %144 = arith.addf %77, %143 : vector<1x256xf32>
    %145 = arith.subf %94, %8 : vector<2x2x256xf32>
    %146 = math.absf %145 : vector<2x2x256xf32>
    %cst_59 = arith.constant 1.000000e+00 : f32
    %147 = vector.broadcast %cst_59 : f32 to vector<2x2x256xf32>
    %148 = arith.cmpf olt, %146, %147 : vector<2x2x256xf32>
    %cst_60 = arith.constant 5.000000e-01 : f32
    %149 = vector.broadcast %cst_60 : f32 to vector<2x2x256xf32>
    %150 = arith.mulf %149, %145 : vector<2x2x256xf32>
    %151 = arith.mulf %150, %145 : vector<2x2x256xf32>
    %cst_61 = arith.constant 5.000000e-01 : f32
    %152 = vector.broadcast %cst_61 : f32 to vector<2x2x256xf32>
    %153 = arith.subf %146, %152 : vector<2x2x256xf32>
    %154 = arith.select %148, %151, %153 : vector<2x2x256xi1>, vector<2x2x256xf32>
    %cst_62 = arith.constant dense<0.000000e+00> : vector<2x256xf32>
    %155 = vector.multi_reduction <add>, %154, %cst_62 [1] : vector<2x2x256xf32> to vector<2x256xf32>
    %156 = arith.mulf %155, %10 : vector<2x256xf32>
    %cst_63 = arith.constant dense<0.000000e+00> : vector<256xf32>
    %157 = vector.multi_reduction <add>, %156, %cst_63 [0] : vector<2x256xf32> to vector<256xf32>
    %158 = vector.shape_cast %157 : vector<256xf32> to vector<1x256xf32>
    %159 = arith.addf %92, %158 : vector<1x256xf32>
    %cst_64 = arith.constant 0.000000e+00 : f32
    %160 = vector.broadcast %cst_64 : f32 to vector<1x256xf32>
    %161 = arith.select %16, %129, %160 : vector<1x256xi1>, vector<1x256xf32>
    %162 = arith.select %16, %144, %160 : vector<1x256xi1>, vector<1x256xf32>
    %163 = arith.select %16, %159, %160 : vector<1x256xi1>, vector<1x256xf32>
    %164 = tpu.concatenate %161, %162, %163 in 0 : vector<1x256xf32>, vector<1x256xf32>, vector<1x256xf32> -> vector<3x256xf32>
    %c0_65 = arith.constant 0 : index
    %c0_66 = arith.constant 0 : index
    %c0_67 = arith.constant 0 : index
    %165 = vector.load %arg9[%c0_65, %c0_66, %c0_67] : memref<1x3x256xf32, #tpu.memory_space<vmem>>, vector<1x3x256xf32>
    %166 = vector.shape_cast %164 : vector<3x256xf32> to vector<1x3x256xf32>
    %167 = arith.addf %165, %166 : vector<1x3x256xf32>
    %c0_68 = arith.constant 0 : index
    %c0_69 = arith.constant 0 : index
    %c0_70 = arith.constant 0 : index
    %168 = vector.load %arg9[%c0_68, %c0_69, %c0_70] : memref<1x3x256xf32, #tpu.memory_space<vmem>>, vector<1x3x256xf32>
    tpu.vector_store %arg9[%c0_68, %c0_69, %c0_70], %167 {strides = array<i32>} : memref<1x3x256xf32, #tpu.memory_space<vmem>>, vector<1x3x256xf32>,
    return
  }
  func.func @transform_0(%arg0: i32, %arg1: i32) -> (i32, i32, i32) {
    %c1_i32 = arith.constant 1 : i32
    %0 = arith.muli %arg0, %c1_i32 : i32
    %1 = arith.addi %0, %arg1 : i32
    %c0_i32 = arith.constant 0 : i32
    %c0_i32_0 = arith.constant 0 : i32
    %c0_i32_1 = arith.constant 0 : i32
    return %c0_i32, %c0_i32_0, %1 : i32, i32, i32
  }
  func.func @transform_1(%arg0: i32, %arg1: i32) -> (i32, i32, i32) {
    %c1_i32 = arith.constant 1 : i32
    %0 = arith.muli %arg0, %c1_i32 : i32
    %1 = arith.addi %0, %arg1 : i32
    %c0_i32 = arith.constant 0 : i32
    %c0_i32_0 = arith.constant 0 : i32
    %c0_i32_1 = arith.constant 0 : i32
    return %c0_i32, %c0_i32_0, %1 : i32, i32, i32
  }
  func.func @transform_2(%arg0: i32, %arg1: i32) -> (i32, i32, i32) {
    %c1_i32 = arith.constant 1 : i32
    %0 = arith.muli %arg0, %c1_i32 : i32
    %1 = arith.addi %0, %arg1 : i32
    %c0_i32 = arith.constant 0 : i32
    %c0_i32_0 = arith.constant 0 : i32
    %c0_i32_1 = arith.constant 0 : i32
    return %c0_i32, %c0_i32_0, %1 : i32, i32, i32
  }
  func.func @transform_3(%arg0: i32, %arg1: i32) -> (i32, i32, i32) {
    %c1_i32 = arith.constant 1 : i32
    %0 = arith.muli %arg0, %c1_i32 : i32
    %1 = arith.addi %0, %arg1 : i32
    %c0_i32 = arith.constant 0 : i32
    %c0_i32_0 = arith.constant 0 : i32
    %c0_i32_1 = arith.constant 0 : i32
    return %c0_i32, %c0_i32_0, %1 : i32, i32, i32
  }
  func.func @transform_4(%arg0: i32, %arg1: i32) -> (i32, i32, i32) {
    %c1_i32 = arith.constant 1 : i32
    %0 = arith.muli %arg0, %c1_i32 : i32
    %1 = arith.addi %0, %arg1 : i32
    %c0_i32 = arith.constant 0 : i32
    %c0_i32_0 = arith.constant 0 : i32
    %c0_i32_1 = arith.constant 0 : i32
    return %c0_i32, %c0_i32_0, %1 : i32, i32, i32
  }
  func.func @transform_5(%arg0: i32, %arg1: i32) -> (i32, i32, i32) {
    %c1_i32 = arith.constant 1 : i32
    %0 = arith.muli %arg0, %c1_i32 : i32
    %1 = arith.addi %0, %arg1 : i32
    %c0_i32 = arith.constant 0 : i32
    %c0_i32_0 = arith.constant 0 : i32
    %c0_i32_1 = arith.constant 0 : i32
    return %c0_i32, %c0_i32_0, %1 : i32, i32, i32
  }
  func.func @transform_6(%arg0: i32, %arg1: i32) -> (i32, i32, i32) {
    %c1_i32 = arith.constant 1 : i32
    %0 = arith.muli %arg0, %c1_i32 : i32
    %1 = arith.addi %0, %arg1 : i32
    %c0_i32 = arith.constant 0 : i32
    %c0_i32_0 = arith.constant 0 : i32
    %c0_i32_1 = arith.constant 0 : i32
    return %c0_i32, %c0_i32_0, %1 : i32, i32, i32
  }
  func.func @transform_7(%arg0: i32, %arg1: i32) -> (i32, i32, i32) {
    %c0_i32 = arith.constant 0 : i32
    %c0_i32_0 = arith.constant 0 : i32
    %c0_i32_1 = arith.constant 0 : i32
    return %arg0, %c0_i32, %c0_i32_0 : i32, i32, i32
  }
}

</mosaic_0001>

<llo_original>
// kernel: tpu_custom_call.1
$region0: #{tpu_custom_call.1}
  #allocation0 [shape = 'u32[]', space=smem, size = 0x4, offset = 0x4, fixed_abs, tag = 'smem constant byte address 0x4 - core index']
  #allocation1 [shape = 'u32[144,128]{1,0:T(1,128)}', space=vmem, size = 0x12000, scoped, tag = 'internal scratch']
  %s0 = inlined_call_operand.vmem [shape: f32[2,9,256], index: 0, kind: input, shape index: {}]
  %s1 = inlined_call_operand.vmem [shape: f32[2,2,256], index: 1, kind: input, shape index: {}]
  %s2 = inlined_call_operand.vmem [shape: f32[2,2,256], index: 2, kind: input, shape index: {}]
  %s3 = inlined_call_operand.vmem [shape: f32[2,4,256], index: 3, kind: input, shape index: {}]
  %s4 = inlined_call_operand.vmem [shape: f32[2,2,256], index: 4, kind: input, shape index: {}]
  %s5 = inlined_call_operand.vmem [shape: f32[2,2,256], index: 5, kind: input, shape index: {}]
  %s6 = inlined_call_operand.vmem [shape: f32[2,4,256], index: 6, kind: input, shape index: {}]
  %s7 = inlined_call_operand.vmem [shape: f32[1,3,256], index: 7, kind: output, shape index: {}]
  %s8 = sld [smem:[#allocation0]]
  $region42: #{tpu_custom_call.1} parent=0
    _
  %s10 = ssub.s32 1, %s8
  %s11 = scalar_select 0, %s10, %s8
  // Predicated region
  $region2: #{tpu_custom_call.1} parent=0 // pred_check
    _
  $region3: #{tpu_custom_call.1} parent=0 // pred_check_branch
    %13 = sbr.rel (0) target = $region5
  $region4: #{tpu_custom_call.1} parent=0 // pred_region
    %s14 = sadd.s32 0, 0
    %s15 = smul.u32 2, %s14
    %p16 = scmp.lt.s32.totalorder %s15, 1
    %s17 = scalar_select %p16, %s15, 1
    %s18 = smul.addr %s17, 8
    %s19 = scalar_lea.vmem %s0, %s18
    %s20 = sadd.s32 0, 0
    %s21 = smul.u32 2, %s20
  $region5: #{tpu_custom_call.1} parent=0 // pred_fallthru
    _
  // Predicated region
  $region6: #{tpu_custom_call.1} parent=0 // pred_check
    _
  $region7: #{tpu_custom_call.1} parent=0 // pred_check_branch
    %23 = sbr.rel (0) target = $region9
  $region8: #{tpu_custom_call.1} parent=0 // pred_region
    %s24 = sadd.s32 0, 0
    %s25 = smul.u32 2, %s24
    %p26 = scmp.lt.s32.totalorder %s25, 1
    %s27 = scalar_select %p26, %s25, 1
    %s28 = smul.addr %s27, 2
    %s29 = scalar_lea.vmem %s1, %s28
    %s30 = sadd.s32 0, 0
    %s31 = smul.u32 2, %s30
  $region9: #{tpu_custom_call.1} parent=0 // pred_fallthru
    _
  // Predicated region
  $region10: #{tpu_custom_call.1} parent=0 // pred_check
    _
  $region11: #{tpu_custom_call.1} parent=0 // pred_check_branch
    %33 = sbr.rel (0) target = $region13
  $region12: #{tpu_custom_call.1} parent=0 // pred_region
    %s34 = sadd.s32 0, 0
    %s35 = smul.u32 2, %s34
    %p36 = scmp.lt.s32.totalorder %s35, 1
    %s37 = scalar_select %p36, %s35, 1
    %s38 = smul.addr %s37, 2
    %s39 = scalar_lea.vmem %s2, %s38
    %s40 = sadd.s32 0, 0
    %s41 = smul.u32 2, %s40
  $region13: #{tpu_custom_call.1} parent=0 // pred_fallthru
    _
  // Predicated region
  $region14: #{tpu_custom_call.1} parent=0 // pred_check
    _
  $region15: #{tpu_custom_call.1} parent=0 // pred_check_branch
    %43 = sbr.rel (0) target = $region17
  $region16: #{tpu_custom_call.1} parent=0 // pred_region
    %s44 = sadd.s32 0, 0
    %s45 = smul.u32 2, %s44
    %p46 = scmp.lt.s32.totalorder %s45, 1
    %s47 = scalar_select %p46, %s45, 1
    %s48 = smul.addr %s47, 4
    %s49 = scalar_lea.vmem %s3, %s48
    %s50 = sadd.s32 0, 0
    %s51 = smul.u32 2, %s50
  $region17: #{tpu_custom_call.1} parent=0 // pred_fallthru
    _
  // Predicated region
  $region18: #{tpu_custom_call.1} parent=0 // pred_check
    _
  $region19: #{tpu_custom_call.1} parent=0 // pred_check_branch
    %53 = sbr.rel (0) target = $region21
  $region20: #{tpu_custom_call.1} parent=0 // pred_region
    %s54 = sadd.s32 0, 0
    %s55 = smul.u32 2, %s54
    %p56 = scmp.lt.s32.totalorder %s55, 1
    %s57 = scalar_select %p56, %s55, 1
    %s58 = smul.addr %s57, 2
    %s59 = scalar_lea.vmem %s4, %s58
    %s60 = sadd.s32 0, 0
    %s61 = smul.u32 2, %s60
  $region21: #{tpu_custom_call.1} parent=0 // pred_fallthru
    _
  // Predicated region
  $region22: #{tpu_custom_call.1} parent=0 // pred_check
    _
  $region23: #{tpu_custom_call.1} parent=0 // pred_check_branch
    %63 = sbr.rel (0) target = $region25
  $region24: #{tpu_custom_call.1} parent=0 // pred_region
    %s64 = sadd.s32 0, 0
    %s65 = smul.u32 2, %s64
    %p66 = scmp.lt.s32.totalorder %s65, 1
    %s67 = scalar_select %p66, %s65, 1
    %s68 = smul.addr %s67, 2
    %s69 = scalar_lea.vmem %s5, %s68
    %s70 = sadd.s32 0, 0
    %s71 = smul.u32 2, %s70
  $region25: #{tpu_custom_call.1} parent=0 // pred_fallthru
    _
  // Predicated region
  $region26: #{tpu_custom_call.1} parent=0 // pred_check
    _
  $region27: #{tpu_custom_call.1} parent=0 // pred_check_branch
    %73 = sbr.rel (0) target = $region29
  $region28: #{tpu_custom_call.1} parent=0 // pred_region
    %s74 = sadd.s32 0, 0
    %s75 = smul.u32 2, %s74
    %p76 = scmp.lt.s32.totalorder %s75, 1
    %s77 = scalar_select %p76, %s75, 1
    %s78 = smul.addr %s77, 4
    %s79 = scalar_lea.vmem %s6, %s78
    %s80 = sadd.s32 0, 0
    %s81 = smul.u32 2, %s80
  $region29: #{tpu_custom_call.1} parent=0 // pred_fallthru
    _
  %s82 = sadd.s32 0, 0
  %s83 = smul.u32 2, %s82
  %p84 = scmp.lt.s32.totalorder %s83, 1
  %s85 = scalar_select %p84, %s83, 1
  %s86 = smul.addr %s85, 8
  %s87 = scalar_lea.vmem %s0, %s86
  %s88 = sadd.s32 0, 0
  %s89 = smul.u32 2, %s88
  %p90 = scmp.lt.s32.totalorder %s89, 1
  %s91 = scalar_select %p90, %s89, 1
  %s92 = smul.addr %s91, 2
  %s93 = scalar_lea.vmem %s1, %s92
  %s94 = sadd.s32 0, 0
  %s95 = smul.u32 2, %s94
  %p96 = scmp.lt.s32.totalorder %s95, 1
  %s97 = scalar_select %p96, %s95, 1
  %s98 = smul.addr %s97, 2
  %s99 = scalar_lea.vmem %s2, %s98
  %s100 = sadd.s32 0, 0
  %s101 = smul.u32 2, %s100
  %p102 = scmp.lt.s32.totalorder %s101, 1
  %s103 = scalar_select %p102, %s101, 1
  %s104 = smul.addr %s103, 4
  %s105 = scalar_lea.vmem %s3, %s104
  %s106 = sadd.s32 0, 0
  %s107 = smul.u32 2, %s106
  %p108 = scmp.lt.s32.totalorder %s107, 1
  %s109 = scalar_select %p108, %s107, 1
  %s110 = smul.addr %s109, 2
  %s111 = scalar_lea.vmem %s4, %s110
  %s112 = sadd.s32 0, 0
  %s113 = smul.u32 2, %s112
  %p114 = scmp.lt.s32.totalorder %s113, 1
  %s115 = scalar_select %p114, %s113, 1
  %s116 = smul.addr %s115, 2
  %s117 = scalar_lea.vmem %s5, %s116
  %s118 = sadd.s32 0, 0
  %s119 = smul.u32 2, %s118
  %p120 = scmp.lt.s32.totalorder %s119, 1
  %s121 = scalar_select %p120, %s119, 1
  %s122 = smul.addr %s121, 4
  %s123 = scalar_lea.vmem %s6, %s122
  %s124 = sadd.s32 0, 0
  %s125 = smul.u32 2, %s124
  %p126 = scmp.lt.s32.totalorder %s125, 1
  %s127 = scalar_select %p126, %s125, 1
  %s128 = smul.addr %s127, 8
  %s129 = scalar_lea.vmem %s0, %s128
  %s130 = sadd.s32 0, 0
  %s131 = smul.u32 2, %s130
  %s132 = sadd.s32 0, 0
  %s133 = smul.u32 2, %s132
  %p134 = scmp.lt.s32.totalorder %s133, 1
  %s135 = scalar_select %p134, %s133, 1
  %s136 = smul.addr %s135, 2
  %s137 = scalar_lea.vmem %s1, %s136
  %s138 = sadd.s32 0, 0
  %s139 = smul.u32 2, %s138
  %s140 = sadd.s32 0, 0
  %s141 = smul.u32 2, %s140
  %p142 = scmp.lt.s32.totalorder %s141, 1
  %s143 = scalar_select %p142, %s141, 1
  %s144 = smul.addr %s143, 2
  %s145 = scalar_lea.vmem %s2, %s144
  %s146 = sadd.s32 0, 0
  %s147 = smul.u32 2, %s146
  %s148 = sadd.s32 0, 0
  %s149 = smul.u32 2, %s148
  %p150 = scmp.lt.s32.totalorder %s149, 1
  %s151 = scalar_select %p150, %s149, 1
  %s152 = smul.addr %s151, 4
  %s153 = scalar_lea.vmem %s3, %s152
  %s154 = sadd.s32 0, 0
  %s155 = smul.u32 2, %s154
  %s156 = sadd.s32 0, 0
  %s157 = smul.u32 2, %s156
  %p158 = scmp.lt.s32.totalorder %s157, 1
  %s159 = scalar_select %p158, %s157, 1
  %s160 = smul.addr %s159, 2
  %s161 = scalar_lea.vmem %s4, %s160
  %s162 = sadd.s32 0, 0
  %s163 = smul.u32 2, %s162
  %s164 = sadd.s32 0, 0
  %s165 = smul.u32 2, %s164
  %p166 = scmp.lt.s32.totalorder %s165, 1
  %s167 = scalar_select %p166, %s165, 1
  %s168 = smul.addr %s167, 2
  %s169 = scalar_lea.vmem %s5, %s168
  %s170 = sadd.s32 0, 0
  %s171 = smul.u32 2, %s170
  %s172 = sadd.s32 0, 0
  %s173 = smul.u32 2, %s172
  %p174 = scmp.lt.s32.totalorder %s173, 1
  %s175 = scalar_select %p174, %s173, 1
  %s176 = smul.addr %s175, 4
  %s177 = scalar_lea.vmem %s6, %s176
  %s178 = sadd.s32 0, 0
  %s179 = smul.u32 2, %s178
  %s180 = sadd.s32 0, 0
  %p181 = scmp.eq.s32.totalorder 0, 0
  // Predicated region
  $region30: #{tpu_custom_call.1} parent=0 // pred_check
    %p182 = pneg %p181
  $region31: #{tpu_custom_call.1} parent=0 // pred_check_branch
    %184 = sbr.rel (%p182) target = $region33
  $region32: #{tpu_custom_call.1} parent=0 // pred_region
    %185 = vst [vmem:[%s7] sm:$0x77] 0.0
  $region33: #{tpu_custom_call.1} parent=0 // pred_fallthru
    _
  %v186 = vld [vmem:[%s129] sm:$0xff]
  %v187 = vld [vmem:[%s129 + $0x8] sm:$0xff]
  %v188 = vld [vmem:[%s129 + $0x10] sm:$0x1]
  %v189 = vld [vmem:[%s129 + $0x18] sm:$0x1]
  %v190 = vld [vmem:[%s129 + $0x20] sm:$0xff]
  %v191 = vld [vmem:[%s129 + $0x28] sm:$0xff]
  %v192 = vld [vmem:[%s129 + $0x30] sm:$0x1]
  %v193 = vld [vmem:[%s129 + $0x38] sm:$0x1]
  %v194 = vlaneseq
  %v195 = vand.u32 %v194, 127
  %v196 = vadd.s32 %v195, 128
  %s197 = smul.u32 %s180, 256
  %v198 = vstv %s197
  %v199 = vadd.s32 %v198, %v195
  %v200 = vadd.s32 %v198, %v196
  %vm201 = vcmp.lt.s32.totalorder %v199, 256
  %vm202 = vcmp.lt.s32.totalorder %v200, 256
  %vm203 = vcmp.eq.f32.partialorder %v186, 1.0
  %vm204 = vcmp.eq.f32.partialorder %v187, 1.0
  %vm205 = vcmp.eq.f32.partialorder %v190, 1.0
  %vm206 = vcmp.eq.f32.partialorder %v191, 1.0
  %v207 = vsub.f32 1.0, %v186
  %v208 = vsub.f32 1.0, %v187
  %v209 = vsub.f32 1.0, %v190
  %v210 = vsub.f32 1.0, %v191
  %v211 = vmul.f32 %v207, %v207
  %v212 = vmul.f32 %v208, %v208
  %v213 = vmul.f32 %v209, %v209
  %v214 = vmul.f32 %v210, %v210
  %v215 = vmul.f32 %v211, %v211
  %v216 = vmul.f32 %v212, %v212
  %v217 = vmul.f32 %v213, %v213
  %v218 = vmul.f32 %v214, %v214
  %v219 = vld [vmem:[%s137] sm:$0xf]
  %v220 = vld [vmem:[%s137 + $0x4] sm:$0xf]
  %v221 = vld [vmem:[%s145] sm:$0xf]
  %v222 = vld [vmem:[%s145 + $0x4] sm:$0xf]
  %v223 = vld [vmem:[%s153] sm:$0xff]
  %v224 = vld [vmem:[%s153 + $0x8] sm:$0xff]
  %v225 = vand.u32 2147483647, %v223
  %v226 = vand.u32 2147483647, %v224
  %v227 = vsub.f32 0.0, %v225
  %v228 = vsub.f32 0.0, %v226
  %v229 = vmul.f32 %v227, 1.442695
  %v230 = vpow.pop %v229
  %v231 = vmul.f32 %v228, 1.442695
  %v232 = vpow.pop %v231
  %v233 = vadd.f32 %v230, 1.0
  %v234 = vlog2.pop %v233
  %v235 = vmul.f32 %v234, 0.6931472
  %v236 = vmul.f32 -0.5, %v230
  %v237 = vadd.f32 %v236, 1.0
  %v238 = vmul.f32 %v237, %v230
  %v239 = vand.u32 2147483647, %v230
  %vm240 = vcmp.lt.f32.partialorder %v239, 0.0004427343
  %v241 = vsel %vm240, %v238, %v235
  %v242 = vadd.f32 %v232, 1.0
  %v243 = vlog2.pop %v242
  %v244 = vmul.f32 %v243, 0.6931472
  %v245 = vmul.f32 -0.5, %v232
  %v246 = vadd.f32 %v245, 1.0
  %v247 = vmul.f32 %v246, %v232
  %v248 = vand.u32 2147483647, %v232
  %vm249 = vcmp.lt.f32.partialorder %v248, 0.0004427343
  %v250 = vsel %vm249, %v247, %v244
  %vm251 = vcmp.ge.f32.partialorder %v223, 0.0
  %vm252 = vcmp.ge.f32.partialorder %v224, 0.0
  %v253 = vsel %vm251, 1.0, %v230
  %v254 = vsel %vm252, 1.0, %v232
  %v255 = vadd.f32 %v230, 1.0
  %v256 = vadd.f32 %v232, 1.0
  %v257 = vrcp.pop %v255
  %v258 = vmul.f32 %v253, %v257
  %v259 = vrcp.pop %v256
  %v260 = vmul.f32 %v254, %v259
  %v261 = vmin.f32 %v223, 0.0
  %v262 = vmin.f32 %v224, 0.0
  %v263 = vsub.f32 %v261, %v241
  %v264 = vsub.f32 %v262, %v250
  %v265 = vmax.f32 %v223, 0.0
  %v266 = vmax.f32 %v224, 0.0
  %v267 = vsub.f32 0.0, %v265
  %v268 = vsub.f32 0.0, %v266
  %v269 = vsub.f32 %v267, %v241
  %v270 = vsub.f32 %v268, %v250
  %v271 = vsub.f32 1.0, %v258
  %v272 = vsub.f32 1.0, %v260
  %v273 = vmul.f32 %v271, %v271
  %v274 = vmul.f32 %v272, %v272
  %v275 = vmul.f32 %v273, %v263
  %v276 = vmul.f32 %v274, %v264
  %v277 = vmul.f32 %v258, %v258
  %v278 = vmul.f32 %v260, %v260
  %v281 = vcombine.high %v277, %v277
  %v282 = vcombine.high %v278, %v278
  %v285 = vmul.f32 %v215, %v277
  %v286 = vmul.f32 %v216, %v281
  %v287 = vmul.f32 %v217, %v278
  %v288 = vmul.f32 %v218, %v282
  %v291 = vcombine.high %v269, %v269
  %v292 = vcombine.high %v270, %v270
  %v295 = vmul.f32 %v285, %v269
  %v296 = vmul.f32 %v286, %v291
  %v297 = vmul.f32 %v287, %v270
  %v298 = vmul.f32 %v288, %v292
  %v301 = vcombine.high %v275, %v275
  %v302 = vcombine.high %v276, %v276
  %v305 = vsel %vm203, %v275, %v295
  %v306 = vsel %vm204, %v301, %v296
  %v307 = vsel %vm205, %v276, %v297
  %v308 = vsel %vm206, %v302, %v298
  %v309 = vsub.f32 0.0, %v305
  %v310 = vsub.f32 0.0, %v306
  %v311 = vsub.f32 0.0, %v307
  %v312 = vsub.f32 0.0, %v308
  %vm313 = vcmask 1043456
  %v314 = vsel %vm313, %v309, 0.0
  %v315 = vsel %vm313, %v311, 0.0
  %v316 = vadd.f32 %v314, %v315
  %v317 = vrot.slane %v316, 4
  %v318 = vadd.f32 %v316, %v317
  %v319 = vrot.slane %v318, 2
  %v320 = vadd.f32 %v318, %v319
  %v321 = vrot.slane %v320, 1
  %v322 = vadd.f32 %v320, %v321
  %v323 = vsel %vm313, %v310, 0.0
  %v324 = vsel %vm313, %v312, 0.0
  %v325 = vadd.f32 %v323, %v324
  %v326 = vrot.slane %v325, 4
  %v327 = vadd.f32 %v325, %v326
  %v328 = vrot.slane %v327, 2
  %v329 = vadd.f32 %v327, %v328
  %v330 = vrot.slane %v329, 1
  %v331 = vadd.f32 %v329, %v330
  %v332 = vadd.f32 %v322, 0.0
  %v333 = vadd.f32 %v331, 0.0
  %v334 = vmax.f32 %v219, 0.0
  %v335 = vmax.f32 %v220, 0.0
  %v340 = vcombine.high %v186, %v187
  %v342 = vunpack.c.l.s4 1983009808
  %v343 = vunpack.c.0.s8 %v342
  %v344 = vlaneseq
  %v345 = vshrl.u32 %v344, 7
  %v346 = vsub.s32 %v343, %v345
  %v347 = vrot.slane %v340, %v346
  %v348 = vcombine.high %v190, %v191
  %v350 = vunpack.c.l.s4 1983009808
  %v351 = vunpack.c.0.s8 %v350
  %v352 = vlaneseq
  %v353 = vshrl.u32 %v352, 7
  %v354 = vsub.s32 %v351, %v353
  %v355 = vrot.slane %v348, %v354
  %v358 = vmul.f32 %v219, %v347
  %v359 = vmul.f32 %v220, %v355
  %v360 = vsub.f32 %v334, %v358
  %v361 = vsub.f32 %v335, %v359
  %v362 = vand.u32 2147483647, %v219
  %v363 = vand.u32 2147483647, %v220
  %v364 = vsub.f32 0.0, %v362
  %v365 = vsub.f32 0.0, %v363
  %v366 = vmul.f32 %v364, 1.442695
  %v367 = vpow.pop %v366
  %v368 = vmul.f32 %v365, 1.442695
  %v369 = vpow.pop %v368
  %v370 = vadd.f32 %v367, 1.0
  %v371 = vlog2.pop %v370
  %v372 = vmul.f32 %v371, 0.6931472
  %v373 = vmul.f32 -0.5, %v367
  %v374 = vadd.f32 %v373, 1.0
  %v375 = vmul.f32 %v374, %v367
  %v376 = vand.u32 2147483647, %v367
  %vm377 = vcmp.lt.f32.partialorder %v376, 0.0004427343
  %v378 = vsel %vm377, %v375, %v372
  %v379 = vadd.f32 %v369, 1.0
  %v380 = vlog2.pop %v379
  %v381 = vmul.f32 %v380, 0.6931472
  %v382 = vmul.f32 -0.5, %v369
  %v383 = vadd.f32 %v382, 1.0
  %v384 = vmul.f32 %v383, %v369
  %v385 = vand.u32 2147483647, %v369
  %vm386 = vcmp.lt.f32.partialorder %v385, 0.0004427343
  %v387 = vsel %vm386, %v384, %v381
  %v388 = vadd.f32 %v360, %v378
  %v389 = vadd.f32 %v361, %v387
  %v393 = vunpack.c.l.s4 1983009808
  %v394 = vunpack.c.0.s8 %v393
  %v395 = vlaneseq
  %v396 = vshrl.u32 %v395, 7
  %v397 = vsub.s32 %v394, %v396
  %v398 = vrot.slane %v388, %v397
  %v399 = vcombine.high %v398, %v398
  %v401 = vunpack.c.l.s4 1983009808
  %v402 = vunpack.c.0.s8 %v401
  %v403 = vlaneseq
  %v404 = vshrl.u32 %v403, 7
  %v405 = vsub.s32 %v402, %v404
  %v406 = vrot.slane %v389, %v405
  %v407 = vcombine.high %v406, %v406
  %vm412 = vcmask 1041408
  %v413 = vsel %vm412, %v398, 0.0
  %v414 = vrot.slane %v413, 4
  %v415 = vadd.f32 %v413, %v414
  %v416 = vrot.slane %v415, 2
  %v417 = vadd.f32 %v415, %v416
  %v418 = vrot.slane %v417, 1
  %v419 = vadd.f32 %v417, %v418
  %v420 = vsel %vm412, %v399, 0.0
  %v421 = vrot.slane %v420, 4
  %v422 = vadd.f32 %v420, %v421
  %v423 = vrot.slane %v422, 2
  %v424 = vadd.f32 %v422, %v423
  %v425 = vrot.slane %v424, 1
  %v426 = vadd.f32 %v424, %v425
  %v427 = vsel %vm412, %v406, 0.0
  %v428 = vrot.slane %v427, 4
  %v429 = vadd.f32 %v427, %v428
  %v430 = vrot.slane %v429, 2
  %v431 = vadd.f32 %v429, %v430
  %v432 = vrot.slane %v431, 1
  %v433 = vadd.f32 %v431, %v432
  %v434 = vsel %vm412, %v407, 0.0
  %v435 = vrot.slane %v434, 4
  %v436 = vadd.f32 %v434, %v435
  %v437 = vrot.slane %v436, 2
  %v438 = vadd.f32 %v436, %v437
  %v439 = vrot.slane %v438, 1
  %v440 = vadd.f32 %v438, %v439
  %v441 = vmul.f32 %v419, %v188
  %v442 = vmul.f32 %v426, %v189
  %v443 = vmul.f32 %v433, %v192
  %v444 = vmul.f32 %v440, %v193
  %v449 = vrot.slane %v443, 7
  %vm450 = vcmask 1041409
  %v451 = vsel %vm450, %v449, %v441
  %v452 = vrot.slane %v444, 7
  %v453 = vsel %vm450, %v452, %v442
  %v456 = vsel %vm412, %v451, 0.0
  %v457 = vrot.slane %v456, 4
  %v458 = vadd.f32 %v456, %v457
  %v459 = vrot.slane %v458, 2
  %v460 = vadd.f32 %v458, %v459
  %v461 = vrot.slane %v460, 1
  %v462 = vadd.f32 %v460, %v461
  %v463 = vsel %vm412, %v453, 0.0
  %v464 = vrot.slane %v463, 4
  %v465 = vadd.f32 %v463, %v464
  %v466 = vrot.slane %v465, 2
  %v467 = vadd.f32 %v465, %v466
  %v468 = vrot.slane %v467, 1
  %v469 = vadd.f32 %v467, %v468
  %v470 = vadd.f32 %v462, 0.0
  %v471 = vadd.f32 %v469, 0.0
  %v472 = vcombine.high %v347, %v347
  %v473 = vcombine.high %v355, %v355
  %v476 = vsub.f32 %v221, %v472
  %v477 = vsub.f32 %v222, %v473
  %v478 = vand.u32 2147483647, %v476
  %v479 = vand.u32 2147483647, %v477
  %vm480 = vcmp.lt.f32.partialorder %v478, 1.0
  %vm481 = vcmp.lt.f32.partialorder %v479, 1.0
  %v482 = vmul.f32 %v476, 0.5
  %v483 = vmul.f32 %v477, 0.5
  %v484 = vmul.f32 %v482, %v476
  %v485 = vmul.f32 %v483, %v477
  %v486 = vsub.f32 %v478, 0.5
  %v487 = vsub.f32 %v479, 0.5
  %v488 = vsel %vm480, %v484, %v486
  %v489 = vsel %vm481, %v485, %v487
  %v493 = vunpack.c.l.s4 1983009808
  %v494 = vunpack.c.0.s8 %v493
  %v495 = vlaneseq
  %v496 = vshrl.u32 %v495, 7
  %v497 = vsub.s32 %v494, %v496
  %v498 = vrot.slane %v488, %v497
  %v499 = vcombine.high %v498, %v498
  %v501 = vunpack.c.l.s4 1983009808
  %v502 = vunpack.c.0.s8 %v501
  %v503 = vlaneseq
  %v504 = vshrl.u32 %v503, 7
  %v505 = vsub.s32 %v502, %v504
  %v506 = vrot.slane %v489, %v505
  %v507 = vcombine.high %v506, %v506
  %v512 = vsel %vm412, %v498, 0.0
  %v513 = vrot.slane %v512, 4
  %v514 = vadd.f32 %v512, %v513
  %v515 = vrot.slane %v514, 2
  %v516 = vadd.f32 %v514, %v515
  %v517 = vrot.slane %v516, 1
  %v518 = vadd.f32 %v516, %v517
  %v519 = vsel %vm412, %v499, 0.0
  %v520 = vrot.slane %v519, 4
  %v521 = vadd.f32 %v519, %v520
  %v522 = vrot.slane %v521, 2
  %v523 = vadd.f32 %v521, %v522
  %v524 = vrot.slane %v523, 1
  %v525 = vadd.f32 %v523, %v524
  %v526 = vsel %vm412, %v506, 0.0
  %v527 = vrot.slane %v526, 4
  %v528 = vadd.f32 %v526, %v527
  %v529 = vrot.slane %v528, 2
  %v530 = vadd.f32 %v528, %v529
  %v531 = vrot.slane %v530, 1
  %v532 = vadd.f32 %v530, %v531
  %v533 = vsel %vm412, %v507, 0.0
  %v534 = vrot.slane %v533, 4
  %v535 = vadd.f32 %v533, %v534
  %v536 = vrot.slane %v535, 2
  %v537 = vadd.f32 %v535, %v536
  %v538 = vrot.slane %v537, 1
  %v539 = vadd.f32 %v537, %v538
  %v540 = vmul.f32 %v518, %v188
  %v541 = vmul.f32 %v525, %v189
  %v542 = vmul.f32 %v532, %v192
  %v543 = vmul.f32 %v539, %v193
  %v548 = vrot.slane %v542, 7
  %v549 = vsel %vm450, %v548, %v540
  %v550 = vrot.slane %v543, 7
  %v551 = vsel %vm450, %v550, %v541
  %v554 = vsel %vm412, %v549, 0.0
  %v555 = vrot.slane %v554, 4
  %v556 = vadd.f32 %v554, %v555
  %v557 = vrot.slane %v556, 2
  %v558 = vadd.f32 %v556, %v557
  %v559 = vrot.slane %v558, 1
  %v560 = vadd.f32 %v558, %v559
  %v561 = vsel %vm412, %v551, 0.0
  %v562 = vrot.slane %v561, 4
  %v563 = vadd.f32 %v561, %v562
  %v564 = vrot.slane %v563, 2
  %v565 = vadd.f32 %v563, %v564
  %v566 = vrot.slane %v565, 1
  %v567 = vadd.f32 %v565, %v566
  %v568 = vadd.f32 %v560, 0.0
  %v569 = vadd.f32 %v567, 0.0
  %v570 = vld [vmem:[%s161] sm:$0xf]
  %v571 = vld [vmem:[%s161 + $0x4] sm:$0xf]
  %v572 = vld [vmem:[%s169] sm:$0xf]
  %v573 = vld [vmem:[%s169 + $0x4] sm:$0xf]
  %v574 = vld [vmem:[%s177] sm:$0xff]
  %v575 = vld [vmem:[%s177 + $0x8] sm:$0xff]
  %v576 = vand.u32 2147483647, %v574
  %v577 = vand.u32 2147483647, %v575
  %v578 = vsub.f32 0.0, %v576
  %v579 = vsub.f32 0.0, %v577
  %v580 = vmul.f32 %v578, 1.442695
  %v581 = vpow.pop %v580
  %v582 = vmul.f32 %v579, 1.442695
  %v583 = vpow.pop %v582
  %v584 = vadd.f32 %v581, 1.0
  %v585 = vlog2.pop %v584
  %v586 = vmul.f32 %v585, 0.6931472
  %v587 = vmul.f32 -0.5, %v581
  %v588 = vadd.f32 %v587, 1.0
  %v589 = vmul.f32 %v588, %v581
  %v590 = vand.u32 2147483647, %v581
  %vm591 = vcmp.lt.f32.partialorder %v590, 0.0004427343
  %v592 = vsel %vm591, %v589, %v586
  %v593 = vadd.f32 %v583, 1.0
  %v594 = vlog2.pop %v593
  %v595 = vmul.f32 %v594, 0.6931472
  %v596 = vmul.f32 -0.5, %v583
  %v597 = vadd.f32 %v596, 1.0
  %v598 = vmul.f32 %v597, %v583
  %v599 = vand.u32 2147483647, %v583
  %vm600 = vcmp.lt.f32.partialorder %v599, 0.0004427343
  %v601 = vsel %vm600, %v598, %v595
  %vm602 = vcmp.ge.f32.partialorder %v574, 0.0
  %vm603 = vcmp.ge.f32.partialorder %v575, 0.0
  %v604 = vsel %vm602, 1.0, %v581
  %v605 = vsel %vm603, 1.0, %v583
  %v606 = vadd.f32 %v581, 1.0
  %v607 = vadd.f32 %v583, 1.0
  %v608 = vrcp.pop %v606
  %v609 = vmul.f32 %v604, %v608
  %v610 = vrcp.pop %v607
  %v611 = vmul.f32 %v605, %v610
  %v612 = vmin.f32 %v574, 0.0
  %v613 = vmin.f32 %v575, 0.0
  %v614 = vsub.f32 %v612, %v592
  %v615 = vsub.f32 %v613, %v601
  %v616 = vmax.f32 %v574, 0.0
  %v617 = vmax.f32 %v575, 0.0
  %v618 = vsub.f32 0.0, %v616
  %v619 = vsub.f32 0.0, %v617
  %v620 = vsub.f32 %v618, %v592
  %v621 = vsub.f32 %v619, %v601
  %v622 = vsub.f32 1.0, %v609
  %v623 = vsub.f32 1.0, %v611
  %v624 = vmul.f32 %v622, %v622
  %v625 = vmul.f32 %v623, %v623
  %v626 = vmul.f32 %v624, %v614
  %v627 = vmul.f32 %v625, %v615
  %v628 = vmul.f32 %v609, %v609
  %v629 = vmul.f32 %v611, %v611
  %v632 = vcombine.high %v628, %v628
  %v633 = vcombine.high %v629, %v629
  %v636 = vmul.f32 %v215, %v628
  %v637 = vmul.f32 %v216, %v632
  %v638 = vmul.f32 %v217, %v629
  %v639 = vmul.f32 %v218, %v633
  %v642 = vcombine.high %v620, %v620
  %v643 = vcombine.high %v621, %v621
  %v646 = vmul.f32 %v636, %v620
  %v647 = vmul.f32 %v637, %v642
  %v648 = vmul.f32 %v638, %v621
  %v649 = vmul.f32 %v639, %v643
  %v652 = vcombine.high %v626, %v626
  %v653 = vcombine.high %v627, %v627
  %v656 = vsel %vm203, %v626, %v646
  %v657 = vsel %vm204, %v652, %v647
  %v658 = vsel %vm205, %v627, %v648
  %v659 = vsel %vm206, %v653, %v649
  %v660 = vsub.f32 0.0, %v656
  %v661 = vsub.f32 0.0, %v657
  %v662 = vsub.f32 0.0, %v658
  %v663 = vsub.f32 0.0, %v659
  %v664 = vsel %vm313, %v660, 0.0
  %v665 = vsel %vm313, %v662, 0.0
  %v666 = vadd.f32 %v664, %v665
  %v667 = vrot.slane %v666, 4
  %v668 = vadd.f32 %v666, %v667
  %v669 = vrot.slane %v668, 2
  %v670 = vadd.f32 %v668, %v669
  %v671 = vrot.slane %v670, 1
  %v672 = vadd.f32 %v670, %v671
  %v673 = vsel %vm313, %v661, 0.0
  %v674 = vsel %vm313, %v663, 0.0
  %v675 = vadd.f32 %v673, %v674
  %v676 = vrot.slane %v675, 4
  %v677 = vadd.f32 %v675, %v676
  %v678 = vrot.slane %v677, 2
  %v679 = vadd.f32 %v677, %v678
  %v680 = vrot.slane %v679, 1
  %v681 = vadd.f32 %v679, %v680
  %v682 = vadd.f32 %v332, %v672
  %v683 = vadd.f32 %v333, %v681
  %v684 = vmax.f32 %v570, 0.0
  %v685 = vmax.f32 %v571, 0.0
  %v686 = vmul.f32 %v570, %v347
  %v687 = vmul.f32 %v571, %v355
  %v688 = vsub.f32 %v684, %v686
  %v689 = vsub.f32 %v685, %v687
  %v690 = vand.u32 2147483647, %v570
  %v691 = vand.u32 2147483647, %v571
  %v692 = vsub.f32 0.0, %v690
  %v693 = vsub.f32 0.0, %v691
  %v694 = vmul.f32 %v692, 1.442695
  %v695 = vpow.pop %v694
  %v696 = vmul.f32 %v693, 1.442695
  %v697 = vpow.pop %v696
  %v698 = vadd.f32 %v695, 1.0
  %v699 = vlog2.pop %v698
  %v700 = vmul.f32 %v699, 0.6931472
  %v701 = vmul.f32 -0.5, %v695
  %v702 = vadd.f32 %v701, 1.0
  %v703 = vmul.f32 %v702, %v695
  %v704 = vand.u32 2147483647, %v695
  %vm705 = vcmp.lt.f32.partialorder %v704, 0.0004427343
  %v706 = vsel %vm705, %v703, %v700
  %v707 = vadd.f32 %v697, 1.0
  %v708 = vlog2.pop %v707
  %v709 = vmul.f32 %v708, 0.6931472
  %v710 = vmul.f32 -0.5, %v697
  %v711 = vadd.f32 %v710, 1.0
  %v712 = vmul.f32 %v711, %v697
  %v713 = vand.u32 2147483647, %v697
  %vm714 = vcmp.lt.f32.partialorder %v713, 0.0004427343
  %v715 = vsel %vm714, %v712, %v709
  %v716 = vadd.f32 %v688, %v706
  %v717 = vadd.f32 %v689, %v715
  %v721 = vunpack.c.l.s4 1983009808
  %v722 = vunpack.c.0.s8 %v721
  %v723 = vlaneseq
  %v724 = vshrl.u32 %v723, 7
  %v725 = vsub.s32 %v722, %v724
  %v726 = vrot.slane %v716, %v725
  %v727 = vcombine.high %v726, %v726
  %v729 = vunpack.c.l.s4 1983009808
  %v730 = vunpack.c.0.s8 %v729
  %v731 = vlaneseq
  %v732 = vshrl.u32 %v731, 7
  %v733 = vsub.s32 %v730, %v732
  %v734 = vrot.slane %v717, %v733
  %v735 = vcombine.high %v734, %v734
  %v740 = vsel %vm412, %v726, 0.0
  %v741 = vrot.slane %v740, 4
  %v742 = vadd.f32 %v740, %v741
  %v743 = vrot.slane %v742, 2
  %v744 = vadd.f32 %v742, %v743
  %v745 = vrot.slane %v744, 1
  %v746 = vadd.f32 %v744, %v745
  %v747 = vsel %vm412, %v727, 0.0
  %v748 = vrot.slane %v747, 4
  %v749 = vadd.f32 %v747, %v748
  %v750 = vrot.slane %v749, 2
  %v751 = vadd.f32 %v749, %v750
  %v752 = vrot.slane %v751, 1
  %v753 = vadd.f32 %v751, %v752
  %v754 = vsel %vm412, %v734, 0.0
  %v755 = vrot.slane %v754, 4
  %v756 = vadd.f32 %v754, %v755
  %v757 = vrot.slane %v756, 2
  %v758 = vadd.f32 %v756, %v757
  %v759 = vrot.slane %v758, 1
  %v760 = vadd.f32 %v758, %v759
  %v761 = vsel %vm412, %v735, 0.0
  %v762 = vrot.slane %v761, 4
  %v763 = vadd.f32 %v761, %v762
  %v764 = vrot.slane %v763, 2
  %v765 = vadd.f32 %v763, %v764
  %v766 = vrot.slane %v765, 1
  %v767 = vadd.f32 %v765, %v766
  %v768 = vmul.f32 %v746, %v188
  %v769 = vmul.f32 %v753, %v189
  %v770 = vmul.f32 %v760, %v192
  %v771 = vmul.f32 %v767, %v193
  %v776 = vrot.slane %v770, 7
  %v777 = vsel %vm450, %v776, %v768
  %v778 = vrot.slane %v771, 7
  %v779 = vsel %vm450, %v778, %v769
  %v782 = vsel %vm412, %v777, 0.0
  %v783 = vrot.slane %v782, 4
  %v784 = vadd.f32 %v782, %v783
  %v785 = vrot.slane %v784, 2
  %v786 = vadd.f32 %v784, %v785
  %v787 = vrot.slane %v786, 1
  %v788 = vadd.f32 %v786, %v787
  %v789 = vsel %vm412, %v779, 0.0
  %v790 = vrot.slane %v789, 4
  %v791 = vadd.f32 %v789, %v790
  %v792 = vrot.slane %v791, 2
  %v793 = vadd.f32 %v791, %v792
  %v794 = vrot.slane %v793, 1
  %v795 = vadd.f32 %v793, %v794
  %v796 = vadd.f32 %v470, %v788
  %v797 = vadd.f32 %v471, %v795
  %v798 = vsub.f32 %v572, %v472
  %v799 = vsub.f32 %v573, %v473
  %v800 = vand.u32 2147483647, %v798
  %v801 = vand.u32 2147483647, %v799
  %vm802 = vcmp.lt.f32.partialorder %v800, 1.0
  %vm803 = vcmp.lt.f32.partialorder %v801, 1.0
  %v804 = vmul.f32 %v798, 0.5
  %v805 = vmul.f32 %v799, 0.5
  %v806 = vmul.f32 %v804, %v798
  %v807 = vmul.f32 %v805, %v799
  %v808 = vsub.f32 %v800, 0.5
  %v809 = vsub.f32 %v801, 0.5
  %v810 = vsel %vm802, %v806, %v808
  %v811 = vsel %vm803, %v807, %v809
  %v815 = vunpack.c.l.s4 1983009808
  %v816 = vunpack.c.0.s8 %v815
  %v817 = vlaneseq
  %v818 = vshrl.u32 %v817, 7
  %v819 = vsub.s32 %v816, %v818
  %v820 = vrot.slane %v810, %v819
  %v821 = vcombine.high %v820, %v820
  %v823 = vunpack.c.l.s4 1983009808
  %v824 = vunpack.c.0.s8 %v823
  %v825 = vlaneseq
  %v826 = vshrl.u32 %v825, 7
  %v827 = vsub.s32 %v824, %v826
  %v828 = vrot.slane %v811, %v827
  %v829 = vcombine.high %v828, %v828
  %v834 = vsel %vm412, %v820, 0.0
  %v835 = vrot.slane %v834, 4
  %v836 = vadd.f32 %v834, %v835
  %v837 = vrot.slane %v836, 2
  %v838 = vadd.f32 %v836, %v837
  %v839 = vrot.slane %v838, 1
  %v840 = vadd.f32 %v838, %v839
  %v841 = vsel %vm412, %v821, 0.0
  %v842 = vrot.slane %v841, 4
  %v843 = vadd.f32 %v841, %v842
  %v844 = vrot.slane %v843, 2
  %v845 = vadd.f32 %v843, %v844
  %v846 = vrot.slane %v845, 1
  %v847 = vadd.f32 %v845, %v846
  %v848 = vsel %vm412, %v828, 0.0
  %v849 = vrot.slane %v848, 4
  %v850 = vadd.f32 %v848, %v849
  %v851 = vrot.slane %v850, 2
  %v852 = vadd.f32 %v850, %v851
  %v853 = vrot.slane %v852, 1
  %v854 = vadd.f32 %v852, %v853
  %v855 = vsel %vm412, %v829, 0.0
  %v856 = vrot.slane %v855, 4
  %v857 = vadd.f32 %v855, %v856
  %v858 = vrot.slane %v857, 2
  %v859 = vadd.f32 %v857, %v858
  %v860 = vrot.slane %v859, 1
  %v861 = vadd.f32 %v859, %v860
  %v862 = vmul.f32 %v840, %v188
  %v863 = vmul.f32 %v847, %v189
  %v864 = vmul.f32 %v854, %v192
  %v865 = vmul.f32 %v861, %v193
  %v870 = vrot.slane %v864, 7
  %v871 = vsel %vm450, %v870, %v862
  %v872 = vrot.slane %v865, 7
  %v873 = vsel %vm450, %v872, %v863
  %v876 = vsel %vm412, %v871, 0.0
  %v877 = vrot.slane %v876, 4
  %v878 = vadd.f32 %v876, %v877
  %v879 = vrot.slane %v878, 2
  %v880 = vadd.f32 %v878, %v879
  %v881 = vrot.slane %v880, 1
  %v882 = vadd.f32 %v880, %v881
  %v883 = vsel %vm412, %v873, 0.0
  %v884 = vrot.slane %v883, 4
  %v885 = vadd.f32 %v883, %v884
  %v886 = vrot.slane %v885, 2
  %v887 = vadd.f32 %v885, %v886
  %v888 = vrot.slane %v887, 1
  %v889 = vadd.f32 %v887, %v888
  %v890 = vadd.f32 %v568, %v882
  %v891 = vadd.f32 %v569, %v889
  %v892 = vsel %vm201, %v682, 0.0
  %v893 = vsel %vm202, %v683, 0.0
  %v894 = vsel %vm201, %v796, 0.0
  %v895 = vsel %vm202, %v797, 0.0
  %v896 = vsel %vm201, %v890, 0.0
  %v897 = vsel %vm202, %v891, 0.0
  %v900 = vrot.slane %v894, 7
  %v901 = vrot.slane %v895, 7
  %v906 = vrot.slane %v896, 6
  %v907 = vrot.slane %v897, 6
  %vm910 = vcmask 1040384
  %v911 = vsel %vm910, %v892, %v900
  %v912 = vsel %vm910, %v893, %v901
  %v913 = vsel %vm412, %v911, %v906
  %v914 = vsel %vm412, %v912, %v907
  %v915 = vld [vmem:[%s7] sm:$0x77]
  %v918 = vcombine.low %v913, %v914
  %v920 = vadd.f32 %v915, %v918
  %921 = vst [vmem:[%s7] sm:$0x77] %v920
  // Predicated region
  $region34: #{tpu_custom_call.1} parent=0 // pred_check
    _
  $region35: #{tpu_custom_call.1} parent=0 // pred_check_branch
    %923 = sbr.rel (0) target = $region37
  $region36: #{tpu_custom_call.1} parent=0 // pred_region
    _
  $region37: #{tpu_custom_call.1} parent=0 // pred_fallthru
    _
  // Predicated region
  $region38: #{tpu_custom_call.1} parent=0 // pred_check
    _
  $region39: #{tpu_custom_call.1} parent=0 // pred_check_branch
    %925 = sbr.rel (0) target = $region41
  $region40: #{tpu_custom_call.1} parent=0 // pred_region
    _
  $region41: #{tpu_custom_call.1} parent=0 // pred_fallthru
    _

</llo_original>
